<compile_context>
chip_gen: v5e
topology: v5e:2x2
jax: 0.10.0
libtpu: 0.0.40
codegen_flags: <defaults>
</compile_context>

<pallas_src>
import jax
import jax.numpy as jnp
import numpy as np
from jax import lax
from jax.experimental import pallas as pl
from jax.experimental.pallas import tpu as pltpu

VOCAB = 50   # vocab_size
E = 16       # embed_dim
U = 32       # hidden_dim
C = 8        # tagset_size
SLEN = 8     # sequence length (batch is 1, as in the module)


# --------------------------- fused Pallas kernel ------------------------------
def single_lstm_kernel(emb_ref, wiht_ref, whht_ref, b_ref, wtt_ref, bt_ref,
                       out_ref, xp_sc):
    slen = emb_ref.shape[0]
    u = whht_ref.shape[0]

    # Hoisted input projection for ALL timesteps: one MXU op + one bias add.
    xp_sc[...] = (jnp.dot(emb_ref[...], wiht_ref[...],
                          preferred_element_type=jnp.float32)
                  + b_ref[...])                                    # (slen, 4u)

    def step(t, carry):
        h, c = carry
        gates = xp_sc[pl.ds(t, 1), :] + jnp.dot(
            h, whht_ref[...], preferred_element_type=jnp.float32)  # (1, 4u)
        i_g = jax.nn.sigmoid(gates[:, 0 * u:1 * u])
        f_g = jax.nn.sigmoid(gates[:, 1 * u:2 * u])
        g_g = jnp.tanh(gates[:, 2 * u:3 * u])
        o_g = jax.nn.sigmoid(gates[:, 3 * u:4 * u])
        c_new = f_g * c + i_g * g_g
        h_new = o_g * jnp.tanh(c_new)
        return h_new, c_new

    h0 = jnp.zeros((1, u), jnp.float32)
    c0 = jnp.zeros((1, u), jnp.float32)
    h_last, _ = lax.fori_loop(0, slen, step, (h0, c0), unroll=True)

    # hidden2tag on the final hidden state, then log_softmax over classes
    # (PyTorch's implicit dim for a 2-D tensor is dim=1).
    logits = (jnp.dot(h_last, wtt_ref[...],
                      preferred_element_type=jnp.float32)
              + bt_ref[...])                                        # (1, C)
    z = logits - jnp.max(logits, axis=1, keepdims=True)
    out_ref[...] = z - jnp.log(jnp.sum(jnp.exp(z), axis=1, keepdims=True))


def single_lstm_pallas(embeds, wiht, whht, b, wtt, bt):
    slen, _ = embeds.shape
    u = whht.shape[0]
    c = wtt.shape[1]
    return pl.pallas_call(
        single_lstm_kernel,
        out_shape=jax.ShapeDtypeStruct((1, c), jnp.float32),
        grid=(1,),
        in_specs=[
            pl.BlockSpec(embeds.shape, lambda i: (0, 0)),
            pl.BlockSpec(wiht.shape, lambda i: (0, 0)),
            pl.BlockSpec(whht.shape, lambda i: (0, 0)),
            pl.BlockSpec(b.shape, lambda i: (0, 0)),
            pl.BlockSpec(wtt.shape, lambda i: (0, 0)),
            pl.BlockSpec(bt.shape, lambda i: (0, 0)),
        ],
        out_specs=pl.BlockSpec((1, c), lambda i: (0, 0)),
        scratch_shapes=[pltpu.VMEM((slen, 4 * u), jnp.float32)],
        compiler_params=pltpu.CompilerParams(
            dimension_semantics=("arbitrary",)),
    )(embeds, wiht, whht, b, wtt, bt)


# -------------------------- forward (glue + kernel) ---------------------------
def single_lstm_forward(words, p):
    w = words.reshape(-1)                               # words.squeeze()
    embeds = jnp.take(p['embed'], w, axis=0)            # (slen, E) — gather glue
    return single_lstm_pallas(
        embeds,
        p['w_ih'].T,                                    # (E, 4U)
        p['w_hh'].T,                                    # (U, 4U)
        (p['b_ih'] + p['b_hh']).reshape(1, -1),         # (1, 4U)
        p['w_tag'].T,                                   # (U, C)
        p['b_tag'].reshape(1, -1))                      # (1, C)


# ----------------------------- pure-JAX reference -----------------------------
def forward_ref(words, p):
    hp = lax.Precision.HIGHEST
    w = words.reshape(-1)
    embeds = jnp.take(p['embed'], w, axis=0)            # (slen, E)

    def step(carry, x):
        h, c = carry
        gates = (jnp.dot(x, p['w_ih'].T, precision=hp)
                 + jnp.dot(h, p['w_hh'].T, precision=hp)
                 + p['b_ih'] + p['b_hh'])
        i, f, g, o = jnp.split(gates, 4, axis=-1)
        c = jax.nn.sigmoid(f) * c + jax.nn.sigmoid(i) * jnp.tanh(g)
        h = jax.nn.sigmoid(o) * jnp.tanh(c)
        return (h, c), h

    h0 = jnp.zeros((U,), jnp.float32)
    _, H = lax.scan(step, (h0, h0), embeds)             # (slen, U)
    tag_space = jnp.dot(H, p['w_tag'].T, precision=hp) + p['b_tag']   # (slen, C)
    tag_scores = jax.nn.log_softmax(tag_space, axis=1)
    return tag_scores[-1].reshape(1, -1)                # (1, C)


if __name__ == "__main__":
    key = jax.random.PRNGKey(0)
    ks = jax.random.split(key, 8)

    def init(k, shape, scale=0.1):
        return (scale * jax.random.normal(k, shape)).astype(jnp.float32)

    p = {
        'embed': init(ks[0], (VOCAB, E), 1.0),
        'w_ih':  init(ks[1], (4 * U, E)),      # PyTorch lstm.weight_ih_l0
        'w_hh':  init(ks[2], (4 * U, U)),      # PyTorch lstm.weight_hh_l0
        'b_ih':  init(ks[3], (4 * U,)),
        'b_hh':  init(ks[4], (4 * U,)),
        'w_tag': init(ks[5], (C, U)),          # hidden2tag.weight
        'b_tag': init(ks[6], (C,)),            # hidden2tag.bias
    }
    words = jax.random.randint(ks[7], (SLEN, 1), 0, VOCAB, dtype=jnp.int32)

    out = jax.block_until_ready(single_lstm_forward(words, p))   # (1, C)
    ref = forward_ref(words, p)

    assert out.shape == (1, C)
    np.testing.assert_allclose(np.asarray(out), np.asarray(ref),
                               rtol=1e-4, atol=1e-4)
    print("KERNEL_OK")
</pallas_src>

<mosaic_0001>
module attributes {stable_mosaic.version = 11 : i64} {
  func.func @single_lstm_kernel(%arg0: i32, %arg1: memref<8x16xf32, #tpu.memory_space<vmem>>, %arg2: memref<16x128xf32, #tpu.memory_space<vmem>>, %arg3: memref<32x128xf32, #tpu.memory_space<vmem>>, %arg4: memref<1x128xf32, #tpu.memory_space<vmem>>, %arg5: memref<32x8xf32, #tpu.memory_space<vmem>>, %arg6: memref<1x8xf32, #tpu.memory_space<vmem>>, %arg7: memref<1x8xf32, #tpu.memory_space<vmem>>, %arg8: memref<8x128xf32, #tpu.memory_space<vmem>>) attributes {dimension_semantics = [#tpu.dimension_semantics<arbitrary>], iteration_bounds = array<i64: 1>, scalar_prefetch = 0 : i64, scratch_operands = 1 : i64, tpu.core_type = #tpu.core_type<tc>, window_params = [{pipeline_mode = #tpu.pipeline_mode<synchronous>, transform_indices = @transform_0, window_bounds = array<i64: 8, 16>}, {pipeline_mode = #tpu.pipeline_mode<synchronous>, transform_indices = @transform_1, window_bounds = array<i64: 16, 128>}, {pipeline_mode = #tpu.pipeline_mode<synchronous>, transform_indices = @transform_2, window_bounds = array<i64: 32, 128>}, {pipeline_mode = #tpu.pipeline_mode<synchronous>, transform_indices = @transform_3, window_bounds = array<i64: 1, 128>}, {pipeline_mode = #tpu.pipeline_mode<synchronous>, transform_indices = @transform_4, window_bounds = array<i64: 32, 8>}, {pipeline_mode = #tpu.pipeline_mode<synchronous>, transform_indices = @transform_5, window_bounds = array<i64: 1, 8>}, {pipeline_mode = #tpu.pipeline_mode<synchronous>, transform_indices = @transform_6, window_bounds = array<i64: 1, 8>}]} {
    %c0 = arith.constant 0 : index
    %c0_0 = arith.constant 0 : index
    %0 = vector.load %arg1[%c0, %c0_0] : memref<8x16xf32, #tpu.memory_space<vmem>>, vector<8x16xf32>
    %c0_1 = arith.constant 0 : index
    %c0_2 = arith.constant 0 : index
    %1 = vector.load %arg2[%c0_1, %c0_2] : memref<16x128xf32, #tpu.memory_space<vmem>>, vector<16x128xf32>
    %cst = arith.constant dense<0.000000e+00> : vector<8x128xf32>
    %2 = tpu.matmul %0, %1, %cst {dimension_numbers = #tpu.dot_dimension_numbers<[1], [0], [0], [1], [0, 0, 1, 1], [], []>} : vector<8x16xf32>, vector<16x128xf32>, vector<8x128xf32> -> vector<8x128xf32>
    %c0_3 = arith.constant 0 : index
    %c0_4 = arith.constant 0 : index
    %3 = vector.load %arg4[%c0_3, %c0_4] : memref<1x128xf32, #tpu.memory_space<vmem>>, vector<1x128xf32>
    %4 = vector.broadcast %3 : vector<1x128xf32> to vector<8x128xf32>
    %5 = arith.addf %2, %4 : vector<8x128xf32>
    %c0_5 = arith.constant 0 : index
    %c0_6 = arith.constant 0 : index
    %6 = vector.load %arg8[%c0_5, %c0_6] : memref<8x128xf32, #tpu.memory_space<vmem>>, vector<8x128xf32>
    tpu.vector_store %arg8[%c0_5, %c0_6], %5 {strides = array<i32>} : memref<8x128xf32, #tpu.memory_space<vmem>>, vector<8x128xf32>,
    %cst_7 = arith.constant 0.000000e+00 : f32
    %7 = vector.broadcast %cst_7 : f32 to vector<1x32xf32>
    %cst_8 = arith.constant 0.000000e+00 : f32
    %8 = vector.broadcast %cst_8 : f32 to vector<1x32xf32>
    %c0_i32 = arith.constant 0 : i32
    %9 = arith.index_cast %c0_i32 : i32 to index
    %c0_9 = arith.constant 0 : index
    %10 = vector.load %arg8[%9, %c0_9] : memref<8x128xf32, #tpu.memory_space<vmem>>, vector<1x128xf32>
    %c0_10 = arith.constant 0 : index
    %c0_11 = arith.constant 0 : index
    %11 = vector.load %arg3[%c0_10, %c0_11] : memref<32x128xf32, #tpu.memory_space<vmem>>, vector<32x128xf32>
    %cst_12 = arith.constant dense<0.000000e+00> : vector<1x128xf32>
    %12 = tpu.matmul %7, %11, %cst_12 {dimension_numbers = #tpu.dot_dimension_numbers<[1], [0], [0], [1], [0, 0, 1, 1], [], []>} : vector<1x32xf32>, vector<32x128xf32>, vector<1x128xf32> -> vector<1x128xf32>
    %13 = arith.addf %10, %12 : vector<1x128xf32>
    %14 = vector.extract_strided_slice %13 {offsets = [0, 0], sizes = [1, 32], strides = [1, 1]} : vector<1x128xf32> to vector<1x32xf32>
    %15 = arith.negf %14 : vector<1x32xf32>
    %16 = math.exp %15 : vector<1x32xf32>
    %cst_13 = arith.constant 1.000000e+00 : f32
    %17 = vector.broadcast %cst_13 : f32 to vector<1x32xf32>
    %18 = arith.addf %17, %16 : vector<1x32xf32>
    %19 = arith.divf %17, %18 : vector<1x32xf32>
    %20 = vector.extract_strided_slice %13 {offsets = [0, 32], sizes = [1, 32], strides = [1, 1]} : vector<1x128xf32> to vector<1x32xf32>
    %21 = arith.negf %20 : vector<1x32xf32>
    %22 = math.exp %21 : vector<1x32xf32>
    %cst_14 = arith.constant 1.000000e+00 : f32
    %23 = vector.broadcast %cst_14 : f32 to vector<1x32xf32>
    %24 = arith.addf %23, %22 : vector<1x32xf32>
    %25 = arith.divf %23, %24 : vector<1x32xf32>
    %26 = vector.extract_strided_slice %13 {offsets = [0, 64], sizes = [1, 32], strides = [1, 1]} : vector<1x128xf32> to vector<1x32xf32>
    %27 = math.tanh %26 : vector<1x32xf32>
    %28 = vector.extract_strided_slice %13 {offsets = [0, 96], sizes = [1, 32], strides = [1, 1]} : vector<1x128xf32> to vector<1x32xf32>
    %29 = arith.negf %28 : vector<1x32xf32>
    %30 = math.exp %29 : vector<1x32xf32>
    %cst_15 = arith.constant 1.000000e+00 : f32
    %31 = vector.broadcast %cst_15 : f32 to vector<1x32xf32>
    %32 = arith.addf %31, %30 : vector<1x32xf32>
    %33 = arith.divf %31, %32 : vector<1x32xf32>
    %34 = arith.mulf %25, %8 : vector<1x32xf32>
    %35 = arith.mulf %19, %27 : vector<1x32xf32>
    %36 = arith.addf %34, %35 : vector<1x32xf32>
    %37 = math.tanh %36 : vector<1x32xf32>
    %38 = arith.mulf %33, %37 : vector<1x32xf32>
    %c1_i32 = arith.constant 1 : i32
    %39 = arith.index_cast %c1_i32 : i32 to index
    %c0_16 = arith.constant 0 : index
    %40 = vector.load %arg8[%39, %c0_16] : memref<8x128xf32, #tpu.memory_space<vmem>>, vector<1x128xf32>
    %c0_17 = arith.constant 0 : index
    %c0_18 = arith.constant 0 : index
    %41 = vector.load %arg3[%c0_17, %c0_18] : memref<32x128xf32, #tpu.memory_space<vmem>>, vector<32x128xf32>
    %cst_19 = arith.constant dense<0.000000e+00> : vector<1x128xf32>
    %42 = tpu.matmul %38, %41, %cst_19 {dimension_numbers = #tpu.dot_dimension_numbers<[1], [0], [0], [1], [0, 0, 1, 1], [], []>} : vector<1x32xf32>, vector<32x128xf32>, vector<1x128xf32> -> vector<1x128xf32>
    %43 = arith.addf %40, %42 : vector<1x128xf32>
    %44 = vector.extract_strided_slice %43 {offsets = [0, 0], sizes = [1, 32], strides = [1, 1]} : vector<1x128xf32> to vector<1x32xf32>
    %45 = arith.negf %44 : vector<1x32xf32>
    %46 = math.exp %45 : vector<1x32xf32>
    %cst_20 = arith.constant 1.000000e+00 : f32
    %47 = vector.broadcast %cst_20 : f32 to vector<1x32xf32>
    %48 = arith.addf %47, %46 : vector<1x32xf32>
    %49 = arith.divf %47, %48 : vector<1x32xf32>
    %50 = vector.extract_strided_slice %43 {offsets = [0, 32], sizes = [1, 32], strides = [1, 1]} : vector<1x128xf32> to vector<1x32xf32>
    %51 = arith.negf %50 : vector<1x32xf32>
    %52 = math.exp %51 : vector<1x32xf32>
    %cst_21 = arith.constant 1.000000e+00 : f32
    %53 = vector.broadcast %cst_21 : f32 to vector<1x32xf32>
    %54 = arith.addf %53, %52 : vector<1x32xf32>
    %55 = arith.divf %53, %54 : vector<1x32xf32>
    %56 = vector.extract_strided_slice %43 {offsets = [0, 64], sizes = [1, 32], strides = [1, 1]} : vector<1x128xf32> to vector<1x32xf32>
    %57 = math.tanh %56 : vector<1x32xf32>
    %58 = vector.extract_strided_slice %43 {offsets = [0, 96], sizes = [1, 32], strides = [1, 1]} : vector<1x128xf32> to vector<1x32xf32>
    %59 = arith.negf %58 : vector<1x32xf32>
    %60 = math.exp %59 : vector<1x32xf32>
    %cst_22 = arith.constant 1.000000e+00 : f32
    %61 = vector.broadcast %cst_22 : f32 to vector<1x32xf32>
    %62 = arith.addf %61, %60 : vector<1x32xf32>
    %63 = arith.divf %61, %62 : vector<1x32xf32>
    %64 = arith.mulf %55, %36 : vector<1x32xf32>
    %65 = arith.mulf %49, %57 : vector<1x32xf32>
    %66 = arith.addf %64, %65 : vector<1x32xf32>
    %67 = math.tanh %66 : vector<1x32xf32>
    %68 = arith.mulf %63, %67 : vector<1x32xf32>
    %c2_i32 = arith.constant 2 : i32
    %69 = arith.index_cast %c2_i32 : i32 to index
    %c0_23 = arith.constant 0 : index
    %70 = vector.load %arg8[%69, %c0_23] : memref<8x128xf32, #tpu.memory_space<vmem>>, vector<1x128xf32>
    %c0_24 = arith.constant 0 : index
    %c0_25 = arith.constant 0 : index
    %71 = vector.load %arg3[%c0_24, %c0_25] : memref<32x128xf32, #tpu.memory_space<vmem>>, vector<32x128xf32>
    %cst_26 = arith.constant dense<0.000000e+00> : vector<1x128xf32>
    %72 = tpu.matmul %68, %71, %cst_26 {dimension_numbers = #tpu.dot_dimension_numbers<[1], [0], [0], [1], [0, 0, 1, 1], [], []>} : vector<1x32xf32>, vector<32x128xf32>, vector<1x128xf32> -> vector<1x128xf32>
    %73 = arith.addf %70, %72 : vector<1x128xf32>
    %74 = vector.extract_strided_slice %73 {offsets = [0, 0], sizes = [1, 32], strides = [1, 1]} : vector<1x128xf32> to vector<1x32xf32>
    %75 = arith.negf %74 : vector<1x32xf32>
    %76 = math.exp %75 : vector<1x32xf32>
    %cst_27 = arith.constant 1.000000e+00 : f32
    %77 = vector.broadcast %cst_27 : f32 to vector<1x32xf32>
    %78 = arith.addf %77, %76 : vector<1x32xf32>
    %79 = arith.divf %77, %78 : vector<1x32xf32>
    %80 = vector.extract_strided_slice %73 {offsets = [0, 32], sizes = [1, 32], strides = [1, 1]} : vector<1x128xf32> to vector<1x32xf32>
    %81 = arith.negf %80 : vector<1x32xf32>
    %82 = math.exp %81 : vector<1x32xf32>
    %cst_28 = arith.constant 1.000000e+00 : f32
    %83 = vector.broadcast %cst_28 : f32 to vector<1x32xf32>
    %84 = arith.addf %83, %82 : vector<1x32xf32>
    %85 = arith.divf %83, %84 : vector<1x32xf32>
    %86 = vector.extract_strided_slice %73 {offsets = [0, 64], sizes = [1, 32], strides = [1, 1]} : vector<1x128xf32> to vector<1x32xf32>
    %87 = math.tanh %86 : vector<1x32xf32>
    %88 = vector.extract_strided_slice %73 {offsets = [0, 96], sizes = [1, 32], strides = [1, 1]} : vector<1x128xf32> to vector<1x32xf32>
    %89 = arith.negf %88 : vector<1x32xf32>
    %90 = math.exp %89 : vector<1x32xf32>
    %cst_29 = arith.constant 1.000000e+00 : f32
    %91 = vector.broadcast %cst_29 : f32 to vector<1x32xf32>
    %92 = arith.addf %91, %90 : vector<1x32xf32>
    %93 = arith.divf %91, %92 : vector<1x32xf32>
    %94 = arith.mulf %85, %66 : vector<1x32xf32>
    %95 = arith.mulf %79, %87 : vector<1x32xf32>
    %96 = arith.addf %94, %95 : vector<1x32xf32>
    %97 = math.tanh %96 : vector<1x32xf32>
    %98 = arith.mulf %93, %97 : vector<1x32xf32>
    %c3_i32 = arith.constant 3 : i32
    %99 = arith.index_cast %c3_i32 : i32 to index
    %c0_30 = arith.constant 0 : index
    %100 = vector.load %arg8[%99, %c0_30] : memref<8x128xf32, #tpu.memory_space<vmem>>, vector<1x128xf32>
    %c0_31 = arith.constant 0 : index
    %c0_32 = arith.constant 0 : index
    %101 = vector.load %arg3[%c0_31, %c0_32] : memref<32x128xf32, #tpu.memory_space<vmem>>, vector<32x128xf32>
    %cst_33 = arith.constant dense<0.000000e+00> : vector<1x128xf32>
    %102 = tpu.matmul %98, %101, %cst_33 {dimension_numbers = #tpu.dot_dimension_numbers<[1], [0], [0], [1], [0, 0, 1, 1], [], []>} : vector<1x32xf32>, vector<32x128xf32>, vector<1x128xf32> -> vector<1x128xf32>
    %103 = arith.addf %100, %102 : vector<1x128xf32>
    %104 = vector.extract_strided_slice %103 {offsets = [0, 0], sizes = [1, 32], strides = [1, 1]} : vector<1x128xf32> to vector<1x32xf32>
    %105 = arith.negf %104 : vector<1x32xf32>
    %106 = math.exp %105 : vector<1x32xf32>
    %cst_34 = arith.constant 1.000000e+00 : f32
    %107 = vector.broadcast %cst_34 : f32 to vector<1x32xf32>
    %108 = arith.addf %107, %106 : vector<1x32xf32>
    %109 = arith.divf %107, %108 : vector<1x32xf32>
    %110 = vector.extract_strided_slice %103 {offsets = [0, 32], sizes = [1, 32], strides = [1, 1]} : vector<1x128xf32> to vector<1x32xf32>
    %111 = arith.negf %110 : vector<1x32xf32>
    %112 = math.exp %111 : vector<1x32xf32>
    %cst_35 = arith.constant 1.000000e+00 : f32
    %113 = vector.broadcast %cst_35 : f32 to vector<1x32xf32>
    %114 = arith.addf %113, %112 : vector<1x32xf32>
    %115 = arith.divf %113, %114 : vector<1x32xf32>
    %116 = vector.extract_strided_slice %103 {offsets = [0, 64], sizes = [1, 32], strides = [1, 1]} : vector<1x128xf32> to vector<1x32xf32>
    %117 = math.tanh %116 : vector<1x32xf32>
    %118 = vector.extract_strided_slice %103 {offsets = [0, 96], sizes = [1, 32], strides = [1, 1]} : vector<1x128xf32> to vector<1x32xf32>
    %119 = arith.negf %118 : vector<1x32xf32>
    %120 = math.exp %119 : vector<1x32xf32>
    %cst_36 = arith.constant 1.000000e+00 : f32
    %121 = vector.broadcast %cst_36 : f32 to vector<1x32xf32>
    %122 = arith.addf %121, %120 : vector<1x32xf32>
    %123 = arith.divf %121, %122 : vector<1x32xf32>
    %124 = arith.mulf %115, %96 : vector<1x32xf32>
    %125 = arith.mulf %109, %117 : vector<1x32xf32>
    %126 = arith.addf %124, %125 : vector<1x32xf32>
    %127 = math.tanh %126 : vector<1x32xf32>
    %128 = arith.mulf %123, %127 : vector<1x32xf32>
    %c4_i32 = arith.constant 4 : i32
    %129 = arith.index_cast %c4_i32 : i32 to index
    %c0_37 = arith.constant 0 : index
    %130 = vector.load %arg8[%129, %c0_37] : memref<8x128xf32, #tpu.memory_space<vmem>>, vector<1x128xf32>
    %c0_38 = arith.constant 0 : index
    %c0_39 = arith.constant 0 : index
    %131 = vector.load %arg3[%c0_38, %c0_39] : memref<32x128xf32, #tpu.memory_space<vmem>>, vector<32x128xf32>
    %cst_40 = arith.constant dense<0.000000e+00> : vector<1x128xf32>
    %132 = tpu.matmul %128, %131, %cst_40 {dimension_numbers = #tpu.dot_dimension_numbers<[1], [0], [0], [1], [0, 0, 1, 1], [], []>} : vector<1x32xf32>, vector<32x128xf32>, vector<1x128xf32> -> vector<1x128xf32>
    %133 = arith.addf %130, %132 : vector<1x128xf32>
    %134 = vector.extract_strided_slice %133 {offsets = [0, 0], sizes = [1, 32], strides = [1, 1]} : vector<1x128xf32> to vector<1x32xf32>
    %135 = arith.negf %134 : vector<1x32xf32>
    %136 = math.exp %135 : vector<1x32xf32>
    %cst_41 = arith.constant 1.000000e+00 : f32
    %137 = vector.broadcast %cst_41 : f32 to vector<1x32xf32>
    %138 = arith.addf %137, %136 : vector<1x32xf32>
    %139 = arith.divf %137, %138 : vector<1x32xf32>
    %140 = vector.extract_strided_slice %133 {offsets = [0, 32], sizes = [1, 32], strides = [1, 1]} : vector<1x128xf32> to vector<1x32xf32>
    %141 = arith.negf %140 : vector<1x32xf32>
    %142 = math.exp %141 : vector<1x32xf32>
    %cst_42 = arith.constant 1.000000e+00 : f32
    %143 = vector.broadcast %cst_42 : f32 to vector<1x32xf32>
    %144 = arith.addf %143, %142 : vector<1x32xf32>
    %145 = arith.divf %143, %144 : vector<1x32xf32>
    %146 = vector.extract_strided_slice %133 {offsets = [0, 64], sizes = [1, 32], strides = [1, 1]} : vector<1x128xf32> to vector<1x32xf32>
    %147 = math.tanh %146 : vector<1x32xf32>
    %148 = vector.extract_strided_slice %133 {offsets = [0, 96], sizes = [1, 32], strides = [1, 1]} : vector<1x128xf32> to vector<1x32xf32>
    %149 = arith.negf %148 : vector<1x32xf32>
    %150 = math.exp %149 : vector<1x32xf32>
    %cst_43 = arith.constant 1.000000e+00 : f32
    %151 = vector.broadcast %cst_43 : f32 to vector<1x32xf32>
    %152 = arith.addf %151, %150 : vector<1x32xf32>
    %153 = arith.divf %151, %152 : vector<1x32xf32>
    %154 = arith.mulf %145, %126 : vector<1x32xf32>
    %155 = arith.mulf %139, %147 : vector<1x32xf32>
    %156 = arith.addf %154, %155 : vector<1x32xf32>
    %157 = math.tanh %156 : vector<1x32xf32>
    %158 = arith.mulf %153, %157 : vector<1x32xf32>
    %c5_i32 = arith.constant 5 : i32
    %159 = arith.index_cast %c5_i32 : i32 to index
    %c0_44 = arith.constant 0 : index
    %160 = vector.load %arg8[%159, %c0_44] : memref<8x128xf32, #tpu.memory_space<vmem>>, vector<1x128xf32>
    %c0_45 = arith.constant 0 : index
    %c0_46 = arith.constant 0 : index
    %161 = vector.load %arg3[%c0_45, %c0_46] : memref<32x128xf32, #tpu.memory_space<vmem>>, vector<32x128xf32>
    %cst_47 = arith.constant dense<0.000000e+00> : vector<1x128xf32>
    %162 = tpu.matmul %158, %161, %cst_47 {dimension_numbers = #tpu.dot_dimension_numbers<[1], [0], [0], [1], [0, 0, 1, 1], [], []>} : vector<1x32xf32>, vector<32x128xf32>, vector<1x128xf32> -> vector<1x128xf32>
    %163 = arith.addf %160, %162 : vector<1x128xf32>
    %164 = vector.extract_strided_slice %163 {offsets = [0, 0], sizes = [1, 32], strides = [1, 1]} : vector<1x128xf32> to vector<1x32xf32>
    %165 = arith.negf %164 : vector<1x32xf32>
    %166 = math.exp %165 : vector<1x32xf32>
    %cst_48 = arith.constant 1.000000e+00 : f32
    %167 = vector.broadcast %cst_48 : f32 to vector<1x32xf32>
    %168 = arith.addf %167, %166 : vector<1x32xf32>
    %169 = arith.divf %167, %168 : vector<1x32xf32>
    %170 = vector.extract_strided_slice %163 {offsets = [0, 32], sizes = [1, 32], strides = [1, 1]} : vector<1x128xf32> to vector<1x32xf32>
    %171 = arith.negf %170 : vector<1x32xf32>
    %172 = math.exp %171 : vector<1x32xf32>
    %cst_49 = arith.constant 1.000000e+00 : f32
    %173 = vector.broadcast %cst_49 : f32 to vector<1x32xf32>
    %174 = arith.addf %173, %172 : vector<1x32xf32>
    %175 = arith.divf %173, %174 : vector<1x32xf32>
    %176 = vector.extract_strided_slice %163 {offsets = [0, 64], sizes = [1, 32], strides = [1, 1]} : vector<1x128xf32> to vector<1x32xf32>
    %177 = math.tanh %176 : vector<1x32xf32>
    %178 = vector.extract_strided_slice %163 {offsets = [0, 96], sizes = [1, 32], strides = [1, 1]} : vector<1x128xf32> to vector<1x32xf32>
    %179 = arith.negf %178 : vector<1x32xf32>
    %180 = math.exp %179 : vector<1x32xf32>
    %cst_50 = arith.constant 1.000000e+00 : f32
    %181 = vector.broadcast %cst_50 : f32 to vector<1x32xf32>
    %182 = arith.addf %181, %180 : vector<1x32xf32>
    %183 = arith.divf %181, %182 : vector<1x32xf32>
    %184 = arith.mulf %175, %156 : vector<1x32xf32>
    %185 = arith.mulf %169, %177 : vector<1x32xf32>
    %186 = arith.addf %184, %185 : vector<1x32xf32>
    %187 = math.tanh %186 : vector<1x32xf32>
    %188 = arith.mulf %183, %187 : vector<1x32xf32>
    %c6_i32 = arith.constant 6 : i32
    %189 = arith.index_cast %c6_i32 : i32 to index
    %c0_51 = arith.constant 0 : index
    %190 = vector.load %arg8[%189, %c0_51] : memref<8x128xf32, #tpu.memory_space<vmem>>, vector<1x128xf32>
    %c0_52 = arith.constant 0 : index
    %c0_53 = arith.constant 0 : index
    %191 = vector.load %arg3[%c0_52, %c0_53] : memref<32x128xf32, #tpu.memory_space<vmem>>, vector<32x128xf32>
    %cst_54 = arith.constant dense<0.000000e+00> : vector<1x128xf32>
    %192 = tpu.matmul %188, %191, %cst_54 {dimension_numbers = #tpu.dot_dimension_numbers<[1], [0], [0], [1], [0, 0, 1, 1], [], []>} : vector<1x32xf32>, vector<32x128xf32>, vector<1x128xf32> -> vector<1x128xf32>
    %193 = arith.addf %190, %192 : vector<1x128xf32>
    %194 = vector.extract_strided_slice %193 {offsets = [0, 0], sizes = [1, 32], strides = [1, 1]} : vector<1x128xf32> to vector<1x32xf32>
    %195 = arith.negf %194 : vector<1x32xf32>
    %196 = math.exp %195 : vector<1x32xf32>
    %cst_55 = arith.constant 1.000000e+00 : f32
    %197 = vector.broadcast %cst_55 : f32 to vector<1x32xf32>
    %198 = arith.addf %197, %196 : vector<1x32xf32>
    %199 = arith.divf %197, %198 : vector<1x32xf32>
    %200 = vector.extract_strided_slice %193 {offsets = [0, 32], sizes = [1, 32], strides = [1, 1]} : vector<1x128xf32> to vector<1x32xf32>
    %201 = arith.negf %200 : vector<1x32xf32>
    %202 = math.exp %201 : vector<1x32xf32>
    %cst_56 = arith.constant 1.000000e+00 : f32
    %203 = vector.broadcast %cst_56 : f32 to vector<1x32xf32>
    %204 = arith.addf %203, %202 : vector<1x32xf32>
    %205 = arith.divf %203, %204 : vector<1x32xf32>
    %206 = vector.extract_strided_slice %193 {offsets = [0, 64], sizes = [1, 32], strides = [1, 1]} : vector<1x128xf32> to vector<1x32xf32>
    %207 = math.tanh %206 : vector<1x32xf32>
    %208 = vector.extract_strided_slice %193 {offsets = [0, 96], sizes = [1, 32], strides = [1, 1]} : vector<1x128xf32> to vector<1x32xf32>
    %209 = arith.negf %208 : vector<1x32xf32>
    %210 = math.exp %209 : vector<1x32xf32>
    %cst_57 = arith.constant 1.000000e+00 : f32
    %211 = vector.broadcast %cst_57 : f32 to vector<1x32xf32>
    %212 = arith.addf %211, %210 : vector<1x32xf32>
    %213 = arith.divf %211, %212 : vector<1x32xf32>
    %214 = arith.mulf %205, %186 : vector<1x32xf32>
    %215 = arith.mulf %199, %207 : vector<1x32xf32>
    %216 = arith.addf %214, %215 : vector<1x32xf32>
    %217 = math.tanh %216 : vector<1x32xf32>
    %218 = arith.mulf %213, %217 : vector<1x32xf32>
    %c7_i32 = arith.constant 7 : i32
    %219 = arith.index_cast %c7_i32 : i32 to index
    %c0_58 = arith.constant 0 : index
    %220 = vector.load %arg8[%219, %c0_58] : memref<8x128xf32, #tpu.memory_space<vmem>>, vector<1x128xf32>
    %c0_59 = arith.constant 0 : index
    %c0_60 = arith.constant 0 : index
    %221 = vector.load %arg3[%c0_59, %c0_60] : memref<32x128xf32, #tpu.memory_space<vmem>>, vector<32x128xf32>
    %cst_61 = arith.constant dense<0.000000e+00> : vector<1x128xf32>
    %222 = tpu.matmul %218, %221, %cst_61 {dimension_numbers = #tpu.dot_dimension_numbers<[1], [0], [0], [1], [0, 0, 1, 1], [], []>} : vector<1x32xf32>, vector<32x128xf32>, vector<1x128xf32> -> vector<1x128xf32>
    %223 = arith.addf %220, %222 : vector<1x128xf32>
    %224 = vector.extract_strided_slice %223 {offsets = [0, 0], sizes = [1, 32], strides = [1, 1]} : vector<1x128xf32> to vector<1x32xf32>
    %225 = arith.negf %224 : vector<1x32xf32>
    %226 = math.exp %225 : vector<1x32xf32>
    %cst_62 = arith.constant 1.000000e+00 : f32
    %227 = vector.broadcast %cst_62 : f32 to vector<1x32xf32>
    %228 = arith.addf %227, %226 : vector<1x32xf32>
    %229 = arith.divf %227, %228 : vector<1x32xf32>
    %230 = vector.extract_strided_slice %223 {offsets = [0, 32], sizes = [1, 32], strides = [1, 1]} : vector<1x128xf32> to vector<1x32xf32>
    %231 = arith.negf %230 : vector<1x32xf32>
    %232 = math.exp %231 : vector<1x32xf32>
    %cst_63 = arith.constant 1.000000e+00 : f32
    %233 = vector.broadcast %cst_63 : f32 to vector<1x32xf32>
    %234 = arith.addf %233, %232 : vector<1x32xf32>
    %235 = arith.divf %233, %234 : vector<1x32xf32>
    %236 = vector.extract_strided_slice %223 {offsets = [0, 64], sizes = [1, 32], strides = [1, 1]} : vector<1x128xf32> to vector<1x32xf32>
    %237 = math.tanh %236 : vector<1x32xf32>
    %238 = vector.extract_strided_slice %223 {offsets = [0, 96], sizes = [1, 32], strides = [1, 1]} : vector<1x128xf32> to vector<1x32xf32>
    %239 = arith.negf %238 : vector<1x32xf32>
    %240 = math.exp %239 : vector<1x32xf32>
    %cst_64 = arith.constant 1.000000e+00 : f32
    %241 = vector.broadcast %cst_64 : f32 to vector<1x32xf32>
    %242 = arith.addf %241, %240 : vector<1x32xf32>
    %243 = arith.divf %241, %242 : vector<1x32xf32>
    %244 = arith.mulf %235, %216 : vector<1x32xf32>
    %245 = arith.mulf %229, %237 : vector<1x32xf32>
    %246 = arith.addf %244, %245 : vector<1x32xf32>
    %247 = math.tanh %246 : vector<1x32xf32>
    %248 = arith.mulf %243, %247 : vector<1x32xf32>
    %c8_i32 = arith.constant 8 : i32
    %c0_65 = arith.constant 0 : index
    %c0_66 = arith.constant 0 : index
    %249 = vector.load %arg5[%c0_65, %c0_66] : memref<32x8xf32, #tpu.memory_space<vmem>>, vector<32x8xf32>
    %cst_67 = arith.constant dense<0.000000e+00> : vector<1x8xf32>
    %250 = tpu.matmul %248, %249, %cst_67 {dimension_numbers = #tpu.dot_dimension_numbers<[1], [0], [0], [1], [0, 0, 1, 1], [], []>} : vector<1x32xf32>, vector<32x8xf32>, vector<1x8xf32> -> vector<1x8xf32>
    %c0_68 = arith.constant 0 : index
    %c0_69 = arith.constant 0 : index
    %251 = vector.load %arg6[%c0_68, %c0_69] : memref<1x8xf32, #tpu.memory_space<vmem>>, vector<1x8xf32>
    %252 = arith.addf %250, %251 : vector<1x8xf32>
    %cst_70 = arith.constant dense<0xFF800000> : vector<1xf32>
    %253 = vector.multi_reduction <maximumf>, %252, %cst_70 [1] : vector<1x8xf32> to vector<1xf32>
    %254 = vector.shape_cast %253 : vector<1xf32> to vector<1x1xf32>
    %255 = vector.broadcast %254 : vector<1x1xf32> to vector<1x8xf32>
    %256 = arith.subf %252, %255 : vector<1x8xf32>
    %257 = math.exp %256 : vector<1x8xf32>
    %cst_71 = arith.constant dense<0.000000e+00> : vector<1xf32>
    %258 = vector.multi_reduction <add>, %257, %cst_71 [1] : vector<1x8xf32> to vector<1xf32>
    %259 = vector.shape_cast %258 : vector<1xf32> to vector<1x1xf32>
    %260 = math.log %259 : vector<1x1xf32>
    %261 = vector.broadcast %260 : vector<1x1xf32> to vector<1x8xf32>
    %262 = arith.subf %256, %261 : vector<1x8xf32>
    %c0_72 = arith.constant 0 : index
    %c0_73 = arith.constant 0 : index
    %263 = vector.load %arg7[%c0_72, %c0_73] : memref<1x8xf32, #tpu.memory_space<vmem>>, vector<1x8xf32>
    tpu.vector_store %arg7[%c0_72, %c0_73], %262 {strides = array<i32>} : memref<1x8xf32, #tpu.memory_space<vmem>>, vector<1x8xf32>,
    return
  }
  func.func @transform_0(%arg0: i32) -> (i32, i32) {
    %c0_i32 = arith.constant 0 : i32
    %c0_i32_0 = arith.constant 0 : i32
    %c0_i32_1 = arith.constant 0 : i32
    return %c0_i32, %c0_i32_0 : i32, i32
  }
  func.func @transform_1(%arg0: i32) -> (i32, i32) {
    %c0_i32 = arith.constant 0 : i32
    %c0_i32_0 = arith.constant 0 : i32
    %c0_i32_1 = arith.constant 0 : i32
    return %c0_i32, %c0_i32_0 : i32, i32
  }
  func.func @transform_2(%arg0: i32) -> (i32, i32) {
    %c0_i32 = arith.constant 0 : i32
    %c0_i32_0 = arith.constant 0 : i32
    %c0_i32_1 = arith.constant 0 : i32
    return %c0_i32, %c0_i32_0 : i32, i32
  }
  func.func @transform_3(%arg0: i32) -> (i32, i32) {
    %c0_i32 = arith.constant 0 : i32
    %c0_i32_0 = arith.constant 0 : i32
    %c0_i32_1 = arith.constant 0 : i32
    return %c0_i32, %c0_i32_0 : i32, i32
  }
  func.func @transform_4(%arg0: i32) -> (i32, i32) {
    %c0_i32 = arith.constant 0 : i32
    %c0_i32_0 = arith.constant 0 : i32
    %c0_i32_1 = arith.constant 0 : i32
    return %c0_i32, %c0_i32_0 : i32, i32
  }
  func.func @transform_5(%arg0: i32) -> (i32, i32) {
    %c0_i32 = arith.constant 0 : i32
    %c0_i32_0 = arith.constant 0 : i32
    %c0_i32_1 = arith.constant 0 : i32
    return %c0_i32, %c0_i32_0 : i32, i32
  }
  func.func @transform_6(%arg0: i32) -> (i32, i32) {
    %c0_i32 = arith.constant 0 : i32
    %c0_i32_0 = arith.constant 0 : i32
    %c0_i32_1 = arith.constant 0 : i32
    return %c0_i32, %c0_i32_0 : i32, i32
  }
}

</mosaic_0001>

<llo_original>
// kernel: tpu_custom_call.1
$region0: #{tpu_custom_call.1}
  #allocation0 [shape = 'u32[]', space=smem, size = 0x4, offset = 0x4, fixed_abs, tag = 'smem constant byte address 0x4 - core index']
  #allocation1 [shape = 'u32[72,128]{1,0:T(1,128)}', space=vmem, size = 0x9000, scoped, tag = 'internal scratch']
  #allocation2 [shape = 'f32[8,128]{1,0:T(8,128)}', space=vmem, size = 0x1000, scoped, tag = 'scratch operand']
  %s0 = inlined_call_operand.vmem [shape: f32[8,16], index: 0, kind: input, shape index: {}]
  %s1 = inlined_call_operand.hbm [shape: f32[16,128], index: 1, kind: input, shape index: {}]
  %s2 = inlined_call_operand.vmem [shape: f32[32,128], index: 2, kind: input, shape index: {}]
  %s3 = inlined_call_operand.vmem [shape: f32[1,128], index: 3, kind: input, shape index: {}]
  %s4 = inlined_call_operand.vmem [shape: f32[32,8], index: 4, kind: input, shape index: {}]
  %s5 = inlined_call_operand.vmem [shape: f32[1,8], index: 5, kind: input, shape index: {}]
  %s6 = inlined_call_operand.hbm [shape: f32[1,8], index: 6, kind: output, shape index: {}]
  %s7 = sld [smem:[#allocation0]]
  $region38: #{tpu_custom_call.1} parent=0
    _
  %s9 = ssub.s32 1, %s7
  %s10 = scalar_select 0, %s9, %s7
  $region1: #{tpu_custom_call.1} parent=0
    #allocation3 [shape = 'u8[8192]{0}', space=vmem, size = 0x2000, scoped, tag = 'input window, operand 1, single buffered']
    #allocation4 [shape = 's32[1]{0}', space=sflag, size = 0x4, scoped, tag = 'scoped memory for tpu_custom_call.1']
    #allocation5 [shape = 's32[1]{0}', space=sflag, size = 0x4, scoped, tag = 'scoped memory for tpu_custom_call.1']
    #allocation6 [shape = 'u8[512]{0}', space=vmem, size = 0x400, scoped, tag = 'output window, operand 0, single buffered']
    %11 = vsyncpa [#allocation4], 0
    %12 = vsyncpa [#allocation5], 0
    // Predicated region
    $region2: #{tpu_custom_call.1} parent=1 // pred_check
      _
    $region3: #{tpu_custom_call.1} parent=1 // pred_check_branch
      %14 = sbr.rel (0) target = $region5
    $region4: #{tpu_custom_call.1} parent=1 // pred_region
      _
    $region5: #{tpu_custom_call.1} parent=1 // pred_fallthru
      _
    // Predicated region
    $region6: #{tpu_custom_call.1} parent=1 // pred_check
      _
    $region7: #{tpu_custom_call.1} parent=1 // pred_check_branch
      %16 = sbr.rel (0) target = $region9
    $region8: #{tpu_custom_call.1} parent=1 // pred_region
      %18 = vsyncadd [#allocation4], 0
      %s19 = sshll.u32 %s1, 4
      %s20 = int_to_ptr.hbm [resolvable:$true] %s19
      %s21 = sshll.u32 [#allocation3], 4
      %s22 = int_to_ptr.vmem [resolvable:$true] %s21
      %27 = dma.hbm_to_vmem [thread:$0]  %s20, 256, %s22, [#allocation4], 128, 128, 8
    $region9: #{tpu_custom_call.1} parent=1 // pred_fallthru
      _
    // Predicated region
    $region10: #{tpu_custom_call.1} parent=1 // pred_check
      _
    $region11: #{tpu_custom_call.1} parent=1 // pred_check_branch
      %29 = sbr.rel (0) target = $region13
    $region12: #{tpu_custom_call.1} parent=1 // pred_region
      _
    $region13: #{tpu_custom_call.1} parent=1 // pred_fallthru
      _
    // Predicated region
    $region14: #{tpu_custom_call.1} parent=1 // pred_check
      _
    $region15: #{tpu_custom_call.1} parent=1 // pred_check_branch
      %31 = sbr.rel (0) target = $region17
    $region16: #{tpu_custom_call.1} parent=1 // pred_region
      _
    $region17: #{tpu_custom_call.1} parent=1 // pred_fallthru
      _
    // Predicated region
    $region18: #{tpu_custom_call.1} parent=1 // pred_check
      _
    $region19: #{tpu_custom_call.1} parent=1 // pred_check_branch
      %33 = sbr.rel (0) target = $region21
    $region20: #{tpu_custom_call.1} parent=1 // pred_region
      _
    $region21: #{tpu_custom_call.1} parent=1 // pred_fallthru
      _
    // Predicated region
    $region22: #{tpu_custom_call.1} parent=1 // pred_check
      _
    $region23: #{tpu_custom_call.1} parent=1 // pred_check_branch
      %35 = sbr.rel (0) target = $region25
    $region24: #{tpu_custom_call.1} parent=1 // pred_region
      _
    $region25: #{tpu_custom_call.1} parent=1 // pred_fallthru
      _
    // Predicated region
    $region26: #{tpu_custom_call.1} parent=1 // pred_check
      _
    $region27: #{tpu_custom_call.1} parent=1 // pred_check_branch
      %37 = sbr.rel (0) target = $region29
    $region28: #{tpu_custom_call.1} parent=1 // pred_region
      %39 = dma.done [#allocation4], 256
    $region29: #{tpu_custom_call.1} parent=1 // pred_fallthru
      _
    %v40 = vld [vmem:[%s0] sm:$0xff]
    %v41 = vld [vmem:[#allocation3] sm:$0xff]
    %v42 = vld [vmem:[#allocation3 + $0x8] sm:$0xff]
    %v43 = vld [vmem:[%s3] sm:$0x1]
    %v45 = vperm.slane %v43, 0
    %vm47 = vcmask 130048
    %v49 = vsel %vm47, %v40, 0
    %51 = vmatpush.msra.mxu0 0.0
    %52 = vmatpush.msra.mxu0 0.0
    %53 = vmatpush.msra.mxu0 0.0
    %54 = vmatpush.msra.mxu0 0.0
    %55 = vmatpush.msra.mxu0 0.0
    %56 = vmatpush.msra.mxu0 0.0
    %57 = vmatpush.msra.mxu0 0.0
    %58 = vmatpush.msra.mxu0 0.0
    %59 = vmatpush.msra.mxu0 0.0
    %60 = vmatpush.msra.mxu0 0.0
    %61 = vmatpush.msra.mxu0 0.0
    %62 = vmatpush.msra.mxu0 0.0
    %63 = vmatpush.msra.mxu0 0.0
    %64 = vmatpush.msra.mxu0 0.0
    %65 = vmatpush.msra.mxu0 %v42
    %66 = vmatpush.msra.mxu0 %v41
    %67 = vmatmul.f32.gmra.mxu0 %v49
    %v68 = vpop.f32.mrf.mxu0
    %v69 = vadd.f32 %v45, %v68
    %70 = vdwg.mxu0
    %71 = vst [vmem:[#allocation2] sm:$0xff] %v69
    %v72 = vld [vmem:[#allocation2] sm:$0x1]
    %v73 = vld [vmem:[%s2] sm:$0xff]
    %v74 = vld [vmem:[%s2 + $0x8] sm:$0xff]
    %v75 = vld [vmem:[%s2 + $0x10] sm:$0xff]
    %v76 = vld [vmem:[%s2 + $0x18] sm:$0xff]
    %vm77 = vcmask 261120
    %v79 = vsel %vm77, 0.0, 0
    %81 = vmatpush.msra.mxu0 0.0
    %82 = vmatpush.msra.mxu0 0.0
    %83 = vmatpush.msra.mxu0 0.0
    %84 = vmatpush.msra.mxu0 0.0
    %85 = vmatpush.msra.mxu0 0.0
    %86 = vmatpush.msra.mxu0 0.0
    %87 = vmatpush.msra.mxu0 0.0
    %88 = vmatpush.msra.mxu0 0.0
    %89 = vmatpush.msra.mxu0 0.0
    %90 = vmatpush.msra.mxu0 0.0
    %91 = vmatpush.msra.mxu0 0.0
    %92 = vmatpush.msra.mxu0 0.0
    %93 = vmatpush.msra.mxu0 %v76
    %94 = vmatpush.msra.mxu0 %v75
    %95 = vmatpush.msra.mxu0 %v74
    %96 = vmatpush.msra.mxu0 %v73
    %97 = vmatmul.f32.gmra.mxu0 %v79
    %v98 = vpop.f32.mrf.mxu0
    %v99 = vadd.f32 0.0, %v98
    %100 = vdwg.mxu0
    %v101 = vadd.f32 %v72, %v99
    %v102 = vxor.u32 %v101, 2147483648
    %v103 = vmul.f32 %v102, 1.442695
    %v104 = vpow.pop %v103
    %v105 = vadd.f32 %v104, 1.0
    %v106 = vrcp.pop %v105
    %v107 = vmul.f32 %v105, %v106
    %v108 = vsub.f32 1.0, %v107
    %v109 = vmul.f32 %v106, %v108
    %v110 = vadd.f32 %v106, %v109
    %vm111 = vweird.f32 %v105
    %vm112 = vweird.f32 %v106
    %vm113 = vmor %vm111, %vm112
    %v114 = vsel %vm113, %v106, %v110
    %v115 = vand.u32 2147483647, %v105
    %vm116 = vcmp.eq.f32.partialorder %v115, 8.507059e+37
    %v117 = vand.u32 %v105, 2147483648
    %v118 = vor.u32 1.1754944e-38, %v117
    %v119 = vsel %vm116, %v118, %v114
    %v120 = vmul.f32 1.0, %v119
    %v121 = vtanh.pop %v101
    %v122 = vmul.f32 %v120, 0.0
    %124 = vrot.lane.b32.xlu0 %v121, 64
    %v125 = vpop.permute.xlu0 %124
    %v127 = vmul.f32 %v120, %v125
    %129 = vrot.lane.b32.xlu0 %v127, 32
    %v130 = vpop.permute.xlu0 %129
    %v132 = vadd.f32 %v122, %v130
    %v133 = vtanh.pop %v132
    %135 = vrot.lane.b32.xlu0 %v133, 64
    %v136 = vpop.permute.xlu0 %135
    %v138 = vmul.f32 %v120, %v136
    %v139 = vld [vmem:[#allocation2 + $0x1] sm:$0x1]
    %141 = vrot.lane.b32.xlu0 %v138, 32
    %v142 = vpop.permute.xlu0 %141
    %v143 = vsel %vm77, %v142, 0
    %145 = vmatpush.msra.mxu0 0.0
    %146 = vmatpush.msra.mxu0 0.0
    %147 = vmatpush.msra.mxu0 0.0
    %148 = vmatpush.msra.mxu0 0.0
    %149 = vmatpush.msra.mxu0 0.0
    %150 = vmatpush.msra.mxu0 0.0
    %151 = vmatpush.msra.mxu0 0.0
    %152 = vmatpush.msra.mxu0 0.0
    %153 = vmatpush.msra.mxu0 0.0
    %154 = vmatpush.msra.mxu0 0.0
    %155 = vmatpush.msra.mxu0 0.0
    %156 = vmatpush.msra.mxu0 0.0
    %157 = vmatpush.msra.mxu0 %v76
    %158 = vmatpush.msra.mxu0 %v75
    %159 = vmatpush.msra.mxu0 %v74
    %160 = vmatpush.msra.mxu0 %v73
    %161 = vmatmul.f32.gmra.mxu0 %v143
    %v162 = vpop.f32.mrf.mxu0
    %v163 = vadd.f32 0.0, %v162
    %164 = vdwg.mxu0
    %v165 = vadd.f32 %v139, %v163
    %v166 = vxor.u32 %v165, 2147483648
    %v167 = vmul.f32 %v166, 1.442695
    %v168 = vpow.pop %v167
    %v169 = vadd.f32 %v168, 1.0
    %v170 = vrcp.pop %v169
    %v171 = vmul.f32 %v169, %v170
    %v172 = vsub.f32 1.0, %v171
    %v173 = vmul.f32 %v170, %v172
    %v174 = vadd.f32 %v170, %v173
    %vm175 = vweird.f32 %v169
    %vm176 = vweird.f32 %v170
    %vm177 = vmor %vm175, %vm176
    %v178 = vsel %vm177, %v170, %v174
    %v179 = vand.u32 2147483647, %v169
    %vm180 = vcmp.eq.f32.partialorder %v179, 8.507059e+37
    %v181 = vand.u32 %v169, 2147483648
    %v182 = vor.u32 1.1754944e-38, %v181
    %v183 = vsel %vm180, %v182, %v178
    %v184 = vmul.f32 1.0, %v183
    %v185 = vtanh.pop %v165
    %v186 = vmul.f32 %v184, %v132
    %188 = vrot.lane.b32.xlu0 %v185, 64
    %v189 = vpop.permute.xlu0 %188
    %v191 = vmul.f32 %v184, %v189
    %193 = vrot.lane.b32.xlu0 %v191, 32
    %v194 = vpop.permute.xlu0 %193
    %v196 = vadd.f32 %v186, %v194
    %v197 = vtanh.pop %v196
    %199 = vrot.lane.b32.xlu0 %v197, 64
    %v200 = vpop.permute.xlu0 %199
    %v202 = vmul.f32 %v184, %v200
    %v203 = vld [vmem:[#allocation2 + $0x2] sm:$0x1]
    %205 = vrot.lane.b32.xlu0 %v202, 32
    %v206 = vpop.permute.xlu0 %205
    %v207 = vsel %vm77, %v206, 0
    %209 = vmatpush.msra.mxu0 0.0
    %210 = vmatpush.msra.mxu0 0.0
    %211 = vmatpush.msra.mxu0 0.0
    %212 = vmatpush.msra.mxu0 0.0
    %213 = vmatpush.msra.mxu0 0.0
    %214 = vmatpush.msra.mxu0 0.0
    %215 = vmatpush.msra.mxu0 0.0
    %216 = vmatpush.msra.mxu0 0.0
    %217 = vmatpush.msra.mxu0 0.0
    %218 = vmatpush.msra.mxu0 0.0
    %219 = vmatpush.msra.mxu0 0.0
    %220 = vmatpush.msra.mxu0 0.0
    %221 = vmatpush.msra.mxu0 %v76
    %222 = vmatpush.msra.mxu0 %v75
    %223 = vmatpush.msra.mxu0 %v74
    %224 = vmatpush.msra.mxu0 %v73
    %225 = vmatmul.f32.gmra.mxu0 %v207
    %v226 = vpop.f32.mrf.mxu0
    %v227 = vadd.f32 0.0, %v226
    %228 = vdwg.mxu0
    %v229 = vadd.f32 %v203, %v227
    %v230 = vxor.u32 %v229, 2147483648
    %v231 = vmul.f32 %v230, 1.442695
    %v232 = vpow.pop %v231
    %v233 = vadd.f32 %v232, 1.0
    %v234 = vrcp.pop %v233
    %v235 = vmul.f32 %v233, %v234
    %v236 = vsub.f32 1.0, %v235
    %v237 = vmul.f32 %v234, %v236
    %v238 = vadd.f32 %v234, %v237
    %vm239 = vweird.f32 %v233
    %vm240 = vweird.f32 %v234
    %vm241 = vmor %vm239, %vm240
    %v242 = vsel %vm241, %v234, %v238
    %v243 = vand.u32 2147483647, %v233
    %vm244 = vcmp.eq.f32.partialorder %v243, 8.507059e+37
    %v245 = vand.u32 %v233, 2147483648
    %v246 = vor.u32 1.1754944e-38, %v245
    %v247 = vsel %vm244, %v246, %v242
    %v248 = vmul.f32 1.0, %v247
    %v249 = vtanh.pop %v229
    %v250 = vmul.f32 %v248, %v196
    %252 = vrot.lane.b32.xlu0 %v249, 64
    %v253 = vpop.permute.xlu0 %252
    %v255 = vmul.f32 %v248, %v253
    %257 = vrot.lane.b32.xlu0 %v255, 32
    %v258 = vpop.permute.xlu0 %257
    %v260 = vadd.f32 %v250, %v258
    %v261 = vtanh.pop %v260
    %263 = vrot.lane.b32.xlu0 %v261, 64
    %v264 = vpop.permute.xlu0 %263
    %v266 = vmul.f32 %v248, %v264
    %v267 = vld [vmem:[#allocation2 + $0x3] sm:$0x1]
    %269 = vrot.lane.b32.xlu0 %v266, 32
    %v270 = vpop.permute.xlu0 %269
    %v271 = vsel %vm77, %v270, 0
    %273 = vmatpush.msra.mxu0 0.0
    %274 = vmatpush.msra.mxu0 0.0
    %275 = vmatpush.msra.mxu0 0.0
    %276 = vmatpush.msra.mxu0 0.0
    %277 = vmatpush.msra.mxu0 0.0
    %278 = vmatpush.msra.mxu0 0.0
    %279 = vmatpush.msra.mxu0 0.0
    %280 = vmatpush.msra.mxu0 0.0
    %281 = vmatpush.msra.mxu0 0.0
    %282 = vmatpush.msra.mxu0 0.0
    %283 = vmatpush.msra.mxu0 0.0
    %284 = vmatpush.msra.mxu0 0.0
    %285 = vmatpush.msra.mxu0 %v76
    %286 = vmatpush.msra.mxu0 %v75
    %287 = vmatpush.msra.mxu0 %v74
    %288 = vmatpush.msra.mxu0 %v73
    %289 = vmatmul.f32.gmra.mxu0 %v271
    %v290 = vpop.f32.mrf.mxu0
    %v291 = vadd.f32 0.0, %v290
    %292 = vdwg.mxu0
    %v293 = vadd.f32 %v267, %v291
    %v294 = vxor.u32 %v293, 2147483648
    %v295 = vmul.f32 %v294, 1.442695
    %v296 = vpow.pop %v295
    %v297 = vadd.f32 %v296, 1.0
    %v298 = vrcp.pop %v297
    %v299 = vmul.f32 %v297, %v298
    %v300 = vsub.f32 1.0, %v299
    %v301 = vmul.f32 %v298, %v300
    %v302 = vadd.f32 %v298, %v301
    %vm303 = vweird.f32 %v297
    %vm304 = vweird.f32 %v298
    %vm305 = vmor %vm303, %vm304
    %v306 = vsel %vm305, %v298, %v302
    %v307 = vand.u32 2147483647, %v297
    %vm308 = vcmp.eq.f32.partialorder %v307, 8.507059e+37
    %v309 = vand.u32 %v297, 2147483648
    %v310 = vor.u32 1.1754944e-38, %v309
    %v311 = vsel %vm308, %v310, %v306
    %v312 = vmul.f32 1.0, %v311
    %v313 = vtanh.pop %v293
    %v314 = vmul.f32 %v312, %v260
    %316 = vrot.lane.b32.xlu0 %v313, 64
    %v317 = vpop.permute.xlu0 %316
    %v319 = vmul.f32 %v312, %v317
    %321 = vrot.lane.b32.xlu0 %v319, 32
    %v322 = vpop.permute.xlu0 %321
    %v324 = vadd.f32 %v314, %v322
    %v325 = vtanh.pop %v324
    %327 = vrot.lane.b32.xlu0 %v325, 64
    %v328 = vpop.permute.xlu0 %327
    %v330 = vmul.f32 %v312, %v328
    %v331 = vld [vmem:[#allocation2 + $0x4] sm:$0x1]
    %333 = vrot.lane.b32.xlu0 %v330, 32
    %v334 = vpop.permute.xlu0 %333
    %v335 = vsel %vm77, %v334, 0
    %337 = vmatpush.msra.mxu0 0.0
    %338 = vmatpush.msra.mxu0 0.0
    %339 = vmatpush.msra.mxu0 0.0
    %340 = vmatpush.msra.mxu0 0.0
    %341 = vmatpush.msra.mxu0 0.0
    %342 = vmatpush.msra.mxu0 0.0
    %343 = vmatpush.msra.mxu0 0.0
    %344 = vmatpush.msra.mxu0 0.0
    %345 = vmatpush.msra.mxu0 0.0
    %346 = vmatpush.msra.mxu0 0.0
    %347 = vmatpush.msra.mxu0 0.0
    %348 = vmatpush.msra.mxu0 0.0
    %349 = vmatpush.msra.mxu0 %v76
    %350 = vmatpush.msra.mxu0 %v75
    %351 = vmatpush.msra.mxu0 %v74
    %352 = vmatpush.msra.mxu0 %v73
    %353 = vmatmul.f32.gmra.mxu0 %v335
    %v354 = vpop.f32.mrf.mxu0
    %v355 = vadd.f32 0.0, %v354
    %356 = vdwg.mxu0
    %v357 = vadd.f32 %v331, %v355
    %v358 = vxor.u32 %v357, 2147483648
    %v359 = vmul.f32 %v358, 1.442695
    %v360 = vpow.pop %v359
    %v361 = vadd.f32 %v360, 1.0
    %v362 = vrcp.pop %v361
    %v363 = vmul.f32 %v361, %v362
    %v364 = vsub.f32 1.0, %v363
    %v365 = vmul.f32 %v362, %v364
    %v366 = vadd.f32 %v362, %v365
    %vm367 = vweird.f32 %v361
    %vm368 = vweird.f32 %v362
    %vm369 = vmor %vm367, %vm368
    %v370 = vsel %vm369, %v362, %v366
    %v371 = vand.u32 2147483647, %v361
    %vm372 = vcmp.eq.f32.partialorder %v371, 8.507059e+37
    %v373 = vand.u32 %v361, 2147483648
    %v374 = vor.u32 1.1754944e-38, %v373
    %v375 = vsel %vm372, %v374, %v370
    %v376 = vmul.f32 1.0, %v375
    %v377 = vtanh.pop %v357
    %v378 = vmul.f32 %v376, %v324
    %380 = vrot.lane.b32.xlu0 %v377, 64
    %v381 = vpop.permute.xlu0 %380
    %v383 = vmul.f32 %v376, %v381
    %385 = vrot.lane.b32.xlu0 %v383, 32
    %v386 = vpop.permute.xlu0 %385
    %v388 = vadd.f32 %v378, %v386
    %v389 = vtanh.pop %v388
    %391 = vrot.lane.b32.xlu0 %v389, 64
    %v392 = vpop.permute.xlu0 %391
    %v394 = vmul.f32 %v376, %v392
    %v395 = vld [vmem:[#allocation2 + $0x5] sm:$0x1]
    %397 = vrot.lane.b32.xlu0 %v394, 32
    %v398 = vpop.permute.xlu0 %397
    %v399 = vsel %vm77, %v398, 0
    %401 = vmatpush.msra.mxu0 0.0
    %402 = vmatpush.msra.mxu0 0.0
    %403 = vmatpush.msra.mxu0 0.0
    %404 = vmatpush.msra.mxu0 0.0
    %405 = vmatpush.msra.mxu0 0.0
    %406 = vmatpush.msra.mxu0 0.0
    %407 = vmatpush.msra.mxu0 0.0
    %408 = vmatpush.msra.mxu0 0.0
    %409 = vmatpush.msra.mxu0 0.0
    %410 = vmatpush.msra.mxu0 0.0
    %411 = vmatpush.msra.mxu0 0.0
    %412 = vmatpush.msra.mxu0 0.0
    %413 = vmatpush.msra.mxu0 %v76
    %414 = vmatpush.msra.mxu0 %v75
    %415 = vmatpush.msra.mxu0 %v74
    %416 = vmatpush.msra.mxu0 %v73
    %417 = vmatmul.f32.gmra.mxu0 %v399
    %v418 = vpop.f32.mrf.mxu0
    %v419 = vadd.f32 0.0, %v418
    %420 = vdwg.mxu0
    %v421 = vadd.f32 %v395, %v419
    %v422 = vxor.u32 %v421, 2147483648
    %v423 = vmul.f32 %v422, 1.442695
    %v424 = vpow.pop %v423
    %v425 = vadd.f32 %v424, 1.0
    %v426 = vrcp.pop %v425
    %v427 = vmul.f32 %v425, %v426
    %v428 = vsub.f32 1.0, %v427
    %v429 = vmul.f32 %v426, %v428
    %v430 = vadd.f32 %v426, %v429
    %vm431 = vweird.f32 %v425
    %vm432 = vweird.f32 %v426
    %vm433 = vmor %vm431, %vm432
    %v434 = vsel %vm433, %v426, %v430
    %v435 = vand.u32 2147483647, %v425
    %vm436 = vcmp.eq.f32.partialorder %v435, 8.507059e+37
    %v437 = vand.u32 %v425, 2147483648
    %v438 = vor.u32 1.1754944e-38, %v437
    %v439 = vsel %vm436, %v438, %v434
    %v440 = vmul.f32 1.0, %v439
    %v441 = vtanh.pop %v421
    %v442 = vmul.f32 %v440, %v388
    %444 = vrot.lane.b32.xlu0 %v441, 64
    %v445 = vpop.permute.xlu0 %444
    %v447 = vmul.f32 %v440, %v445
    %449 = vrot.lane.b32.xlu0 %v447, 32
    %v450 = vpop.permute.xlu0 %449
    %v452 = vadd.f32 %v442, %v450
    %v453 = vtanh.pop %v452
    %455 = vrot.lane.b32.xlu0 %v453, 64
    %v456 = vpop.permute.xlu0 %455
    %v458 = vmul.f32 %v440, %v456
    %v459 = vld [vmem:[#allocation2 + $0x6] sm:$0x1]
    %461 = vrot.lane.b32.xlu0 %v458, 32
    %v462 = vpop.permute.xlu0 %461
    %v463 = vsel %vm77, %v462, 0
    %465 = vmatpush.msra.mxu0 0.0
    %466 = vmatpush.msra.mxu0 0.0
    %467 = vmatpush.msra.mxu0 0.0
    %468 = vmatpush.msra.mxu0 0.0
    %469 = vmatpush.msra.mxu0 0.0
    %470 = vmatpush.msra.mxu0 0.0
    %471 = vmatpush.msra.mxu0 0.0
    %472 = vmatpush.msra.mxu0 0.0
    %473 = vmatpush.msra.mxu0 0.0
    %474 = vmatpush.msra.mxu0 0.0
    %475 = vmatpush.msra.mxu0 0.0
    %476 = vmatpush.msra.mxu0 0.0
    %477 = vmatpush.msra.mxu0 %v76
    %478 = vmatpush.msra.mxu0 %v75
    %479 = vmatpush.msra.mxu0 %v74
    %480 = vmatpush.msra.mxu0 %v73
    %481 = vmatmul.f32.gmra.mxu0 %v463
    %v482 = vpop.f32.mrf.mxu0
    %v483 = vadd.f32 0.0, %v482
    %484 = vdwg.mxu0
    %v485 = vadd.f32 %v459, %v483
    %v486 = vxor.u32 %v485, 2147483648
    %v487 = vmul.f32 %v486, 1.442695
    %v488 = vpow.pop %v487
    %v489 = vadd.f32 %v488, 1.0
    %v490 = vrcp.pop %v489
    %v491 = vmul.f32 %v489, %v490
    %v492 = vsub.f32 1.0, %v491
    %v493 = vmul.f32 %v490, %v492
    %v494 = vadd.f32 %v490, %v493
    %vm495 = vweird.f32 %v489
    %vm496 = vweird.f32 %v490
    %vm497 = vmor %vm495, %vm496
    %v498 = vsel %vm497, %v490, %v494
    %v499 = vand.u32 2147483647, %v489
    %vm500 = vcmp.eq.f32.partialorder %v499, 8.507059e+37
    %v501 = vand.u32 %v489, 2147483648
    %v502 = vor.u32 1.1754944e-38, %v501
    %v503 = vsel %vm500, %v502, %v498
    %v504 = vmul.f32 1.0, %v503
    %v505 = vtanh.pop %v485
    %v506 = vmul.f32 %v504, %v452
    %508 = vrot.lane.b32.xlu0 %v505, 64
    %v509 = vpop.permute.xlu0 %508
    %v511 = vmul.f32 %v504, %v509
    %513 = vrot.lane.b32.xlu0 %v511, 32
    %v514 = vpop.permute.xlu0 %513
    %v516 = vadd.f32 %v506, %v514
    %v517 = vtanh.pop %v516
    %519 = vrot.lane.b32.xlu0 %v517, 64
    %v520 = vpop.permute.xlu0 %519
    %v522 = vmul.f32 %v504, %v520
    %v523 = vld [vmem:[#allocation2 + $0x7] sm:$0x1]
    %525 = vrot.lane.b32.xlu0 %v522, 32
    %v526 = vpop.permute.xlu0 %525
    %v527 = vsel %vm77, %v526, 0
    %529 = vmatpush.msra.mxu0 0.0
    %530 = vmatpush.msra.mxu0 0.0
    %531 = vmatpush.msra.mxu0 0.0
    %532 = vmatpush.msra.mxu0 0.0
    %533 = vmatpush.msra.mxu0 0.0
    %534 = vmatpush.msra.mxu0 0.0
    %535 = vmatpush.msra.mxu0 0.0
    %536 = vmatpush.msra.mxu0 0.0
    %537 = vmatpush.msra.mxu0 0.0
    %538 = vmatpush.msra.mxu0 0.0
    %539 = vmatpush.msra.mxu0 0.0
    %540 = vmatpush.msra.mxu0 0.0
    %541 = vmatpush.msra.mxu0 %v76
    %542 = vmatpush.msra.mxu0 %v75
    %543 = vmatpush.msra.mxu0 %v74
    %544 = vmatpush.msra.mxu0 %v73
    %545 = vmatmul.f32.gmra.mxu0 %v527
    %v546 = vpop.f32.mrf.mxu0
    %v547 = vadd.f32 0.0, %v546
    %548 = vdwg.mxu0
    %v549 = vadd.f32 %v523, %v547
    %v550 = vxor.u32 %v549, 2147483648
    %v551 = vmul.f32 %v550, 1.442695
    %v552 = vpow.pop %v551
    %v553 = vadd.f32 %v552, 1.0
    %v554 = vrcp.pop %v553
    %v555 = vmul.f32 %v553, %v554
    %v556 = vsub.f32 1.0, %v555
    %v557 = vmul.f32 %v554, %v556
    %v558 = vadd.f32 %v554, %v557
    %vm559 = vweird.f32 %v553
    %vm560 = vweird.f32 %v554
    %vm561 = vmor %vm559, %vm560
    %v562 = vsel %vm561, %v554, %v558
    %v563 = vand.u32 2147483647, %v553
    %vm564 = vcmp.eq.f32.partialorder %v563, 8.507059e+37
    %v565 = vand.u32 %v553, 2147483648
    %v566 = vor.u32 1.1754944e-38, %v565
    %v567 = vsel %vm564, %v566, %v562
    %v568 = vmul.f32 1.0, %v567
    %v569 = vtanh.pop %v549
    %v570 = vmul.f32 %v568, %v516
    %572 = vrot.lane.b32.xlu0 %v569, 64
    %v573 = vpop.permute.xlu0 %572
    %v575 = vmul.f32 %v568, %v573
    %577 = vrot.lane.b32.xlu0 %v575, 32
    %v578 = vpop.permute.xlu0 %577
    %v580 = vadd.f32 %v570, %v578
    %v581 = vtanh.pop %v580
    %583 = vrot.lane.b32.xlu0 %v581, 64
    %v584 = vpop.permute.xlu0 %583
    %v586 = vmul.f32 %v568, %v584
    %v587 = vld [vmem:[%s4] sm:$0xff]
    %v588 = vld [vmem:[%s4 + $0x8] sm:$0xff]
    %v589 = vld [vmem:[%s4 + $0x10] sm:$0xff]
    %v590 = vld [vmem:[%s4 + $0x18] sm:$0xff]
    %v591 = vld [vmem:[%s5] sm:$0x1]
    %593 = vrot.lane.b32.xlu0 %v586, 32
    %v594 = vpop.permute.xlu0 %593
    %v595 = vsel %vm77, %v594, 0
    %597 = vmatpush.msra.mxu0 0.0
    %598 = vmatpush.msra.mxu0 0.0
    %599 = vmatpush.msra.mxu0 0.0
    %600 = vmatpush.msra.mxu0 0.0
    %601 = vmatpush.msra.mxu0 0.0
    %602 = vmatpush.msra.mxu0 0.0
    %603 = vmatpush.msra.mxu0 0.0
    %604 = vmatpush.msra.mxu0 0.0
    %605 = vmatpush.msra.mxu0 0.0
    %606 = vmatpush.msra.mxu0 0.0
    %607 = vmatpush.msra.mxu0 0.0
    %608 = vmatpush.msra.mxu0 0.0
    %609 = vmatpush.msra.mxu0 %v590
    %610 = vmatpush.msra.mxu0 %v589
    %611 = vmatpush.msra.mxu0 %v588
    %612 = vmatpush.msra.mxu0 %v587
    %613 = vmatmul.f32.gmra.mxu0 %v595
    %v614 = vpop.f32.mrf.mxu0
    %v615 = vadd.f32 %v591, %v614
    %616 = vdwg.mxu0
    %vm617 = vcmask 57344
    %v618 = vsel %vm617, %v615, -inf
    %619 = vmax.xlane.f32.xlu0 %v618
    %v620 = vpop.xlane.xlu0 %619
    %v621 = vsub.f32 %v615, %v620
    %v622 = vmul.f32 %v621, 1.442695
    %v623 = vpow.pop %v622
    %v624 = vsel %vm617, %v623, 0.0
    %625 = vadd.xlane.f32.xlu0 %v624
    %v626 = vpop.xlane.xlu0 %625
    %v627 = vlog2.pop %v626
    %v628 = vmul.f32 %v627, 0.6931472
    %v629 = vsub.f32 %v621, %v628
    %630 = vst.msk [vmem:[#allocation6] sm:$0x1] %vm617, %v629
    // Predicated region
    $region30: #{tpu_custom_call.1} parent=1 // pred_check
      _
    $region31: #{tpu_custom_call.1} parent=1 // pred_check_branch
      %632 = sbr.rel (0) target = $region33
    $region32: #{tpu_custom_call.1} parent=1 // pred_region
      %634 = vsyncadd [#allocation5], 0
      %s636 = sshll.u32 [#allocation6], 4
      %s637 = int_to_ptr.vmem [resolvable:$true] %s636
      %s638 = sshll.u32 %s6, 4
      %s639 = int_to_ptr.hbm [resolvable:$true] %s638
      %641 = dma.vmem_to_hbm [thread:$0]  %s637, 16, %s639, [#allocation5]
    $region33: #{tpu_custom_call.1} parent=1 // pred_fallthru
      _
    // Predicated region
    $region34: #{tpu_custom_call.1} parent=1 // pred_check
      _
    $region35: #{tpu_custom_call.1} parent=1 // pred_check_branch
      %643 = sbr.rel (0) target = $region37
    $region36: #{tpu_custom_call.1} parent=1 // pred_region
      %645 = dma.done [#allocation5], 16
    $region37: #{tpu_custom_call.1} parent=1 // pred_fallthru
      _
    %646 = vsyncpa [#allocation4], 1
    %647 = vsyncpa [#allocation5], 1

</llo_original>
